<compile_context>
chip_gen: v5e
topology: v5e:2x2
jax: 0.10.0
libtpu: 0.0.40
codegen_flags: <defaults>
</compile_context>

<pallas_src>
import functools

import jax
import jax.numpy as jnp
from jax.experimental import pallas as pl
from jax.experimental.pallas import tpu as pltpu

LANE = 128                      # TPU lane width; hidden/output dims padded to this.
_VMEM_BUDGET_BYTES = 48 << 20   # conservative: fits under v7x's 64 MiB physical VMEM.


def mlp_kernel(x_ref, w_ref, v_ref, o_ref, *, in_dim):
    """Whole forward pass, everything resident in VMEM (no grid).

    x_ref: (N, in_dim)    unpadded input activations
    w_ref: (4, 128, 128)  padded, pre-transposed weights [w1, w2, w3, w4]
    v_ref: (8, 128)       rows = [g1, be1, g2, be2, g3, be3, b4, 0]
    o_ref: (N, 1)         final output (single real column)
    """
    eps = jnp.float32(1e-5)
    inv_n = jnp.float32(1.0 / x_ref.shape[0])

    def bn_relu(h, gamma, beta):
        # PyTorch BatchNorm1d training mode: batch statistics, biased variance.
        # One-pass form: sum(h) and sum(h*h) are independent reductions.
        mean = jnp.sum(h, axis=0, keepdims=True) * inv_n
        mean_sq = jnp.sum(h * h, axis=0, keepdims=True) * inv_n
        var = mean_sq - mean * mean
        s = gamma * jax.lax.rsqrt(var + eps)      # fused affine scale (EUP rsqrt)
        t = beta - mean * s                       # fused affine shift
        return jnp.maximum(h * s + t, 0.0)

    x = x_ref[...]
    w1 = w_ref[0][:in_dim, :]                     # contract only the real input rows

    # layer1 -> bn1 -> relu (residual). Pre-BN bias omitted: cancelled by BN mean.
    h1 = jnp.dot(x, w1, preferred_element_type=jnp.float32)
    res = bn_relu(h1, v_ref[0:1, :], v_ref[1:2, :])

    # layer2 -> bn2 -> relu
    h2 = jnp.dot(res, w_ref[1], preferred_element_type=jnp.float32)
    x2 = bn_relu(h2, v_ref[2:3, :], v_ref[3:4, :])

    # layer3 -> bn3 -> relu, plus residual
    h3 = jnp.dot(x2, w_ref[2], preferred_element_type=jnp.float32)
    x3 = bn_relu(h3, v_ref[4:5, :], v_ref[5:6, :]) + res

    # layer4 (final bias kept); only column 0 is real -> narrow masked store.
    h4 = jnp.dot(x3, w_ref[3], preferred_element_type=jnp.float32) + v_ref[6:7, :]
    o_ref[...] = h4[:, 0:1]


def _pad_mat(w, rows, cols):
    return jnp.zeros((LANE, LANE), jnp.float32).at[:rows, :cols].set(w)


def _pad_row(v):
    v = jnp.asarray(v, jnp.float32).reshape(-1)
    return jnp.zeros((LANE,), jnp.float32).at[:v.shape[0]].set(v)


def pack_params(params):
    """Pack the 14 module parameters into two lane-dense slabs (done once)."""
    (w1, _b1, g1, be1,
     w2, _b2, g2, be2,
     w3, _b3, g3, be3,
     w4, b4) = params
    in_dim, hidden = w1.shape

    w_slab = jnp.stack([
        _pad_mat(w1, in_dim, hidden),
        _pad_mat(w2, hidden, hidden),
        _pad_mat(w3, hidden, hidden),
        _pad_mat(w4, hidden, 1),
    ])  # (4, 128, 128)

    v_slab = jnp.stack([
        _pad_row(g1), _pad_row(be1),
        _pad_row(g2), _pad_row(be2),
        _pad_row(g3), _pad_row(be3),
        _pad_row(b4), jnp.zeros((LANE,), jnp.float32),
    ])  # (8, 128)

    return w_slab, v_slab


def max_resident_batch(in_dim, vmem_budget_bytes=_VMEM_BUDGET_BYTES):
    """Largest batch whose whole-batch-resident forward fits the VMEM budget."""
    # x row + out row + ~6 live (·,128) f32 intermediates (h, res, x2, x3, BN temps).
    bytes_per_row = 4 * (in_dim + 1 + 6 * LANE)
    fixed = 4 * (4 * LANE * LANE + 8 * LANE) + (2 << 20)  # slabs + headroom
    return max(8, (vmem_budget_bytes - fixed) // bytes_per_row)


def make_mlp_forward(params):
    """Returns a jitted forward(x) with parameter slabs packed exactly once."""
    in_dim = params[0].shape[0]
    w_slab, v_slab = pack_params(params)        # packed once; jit closure constants
    kernel = functools.partial(mlp_kernel, in_dim=in_dim)
    n_cap = max_resident_batch(in_dim)

    @jax.jit
    def forward(x):
        n, d = x.shape
        assert d == in_dim, (d, in_dim)
        # TODO(synk): for n > n_cap, switch to an N-tiled grid + two-pass BN.
        assert n <= n_cap, f"batch {n} exceeds single-tile VMEM cap {n_cap}"

        cost = pl.CostEstimate(
            flops=2 * n * LANE * (in_dim + 3 * LANE),
            transcendentals=3 * LANE,
            bytes_accessed=4 * (n * in_dim + 4 * LANE * LANE + 8 * LANE + n),
        )
        # No grid: single invocation, whole arrays resident in VMEM, no
        # double-buffered windows.
        return pl.pallas_call(
            kernel,
            out_shape=jax.ShapeDtypeStruct((n, 1), jnp.float32),
            compiler_params=pltpu.CompilerParams(
                vmem_limit_bytes=_VMEM_BUDGET_BYTES),
            cost_estimate=cost,
        )(x, w_slab, v_slab)

    return forward


def init_params(key, input_dim, hidden_dim=20):
    """Deterministic synthetic parameters mirroring the PyTorch module's shapes.

    Linear weights are stored pre-transposed as (in_features, out_features).
    """
    ks = jax.random.split(key, 8)

    def linear(kw, kb, fan_in, fan_out):
        bound = 1.0 / jnp.sqrt(jnp.float32(fan_in))
        w = jax.random.uniform(kw, (fan_in, fan_out), jnp.float32, -bound, bound)
        b = jax.random.uniform(kb, (1, fan_out), jnp.float32, -bound, bound)
        return w, b

    w1, b1 = linear(ks[0], ks[1], input_dim, hidden_dim)
    w2, b2 = linear(ks[2], ks[3], hidden_dim, hidden_dim)
    w3, b3 = linear(ks[4], ks[5], hidden_dim, hidden_dim)
    w4, b4 = linear(ks[6], ks[7], hidden_dim, 1)

    ones = jnp.ones((1, hidden_dim), jnp.float32)
    zeros = jnp.zeros((1, hidden_dim), jnp.float32)

    return [w1, b1, ones, zeros,
            w2, b2, ones, zeros,
            w3, b3, ones, zeros,
            w4, b4]


def mlp_reference(x, params):
    """Pure-JAX reference (keeps the pre-BN biases; they cancel in BN exactly)."""
    (w1, b1, g1, be1, w2, b2, g2, be2, w3, b3, g3, be3, w4, b4) = params
    eps = 1e-5

    def bn(h, g, b):
        m = jnp.mean(h, axis=0, keepdims=True)
        v = jnp.mean((h - m) ** 2, axis=0, keepdims=True)
        return (h - m) / jnp.sqrt(v + eps) * g + b

    res = jax.nn.relu(bn(x @ w1 + b1, g1, be1))
    x2 = jax.nn.relu(bn(res @ w2 + b2, g2, be2))
    x3 = jax.nn.relu(bn(x2 @ w3 + b3, g3, be3)) + res
    return x3 @ w4 + b4


if __name__ == "__main__":
    batch, input_dim, hidden_dim = 8, 16, 20

    key = jax.random.PRNGKey(0)
    kx, kp = jax.random.split(key)
    x = jax.random.normal(kx, (batch, input_dim), jnp.float32)
    params = init_params(kp, input_dim, hidden_dim)

    forward = make_mlp_forward(params)           # slabs packed once here
    out = jax.block_until_ready(forward(x))

    ref = mlp_reference(x, params)
    assert out.shape == (batch, 1), out.shape
    assert jnp.allclose(out, ref, atol=1e-4, rtol=1e-4), (
        f"max abs err {jnp.max(jnp.abs(out - ref))}")

    print("KERNEL_OK")
</pallas_src>

<mosaic_0001>
module attributes {stable_mosaic.version = 11 : i64} {
  func.func @mlp_kernel(%arg0: memref<8x16xf32, #tpu.memory_space<vmem>>, %arg1: memref<4x128x128xf32, #tpu.memory_space<vmem>>, %arg2: memref<8x128xf32, #tpu.memory_space<vmem>>, %arg3: memref<8x1xf32, #tpu.memory_space<vmem>>) attributes {dimension_semantics = [], scalar_prefetch = 0 : i64, scratch_operands = 0 : i64, tpu.core_type = #tpu.core_type<tc>} {
    %c0 = arith.constant 0 : index
    %c0_0 = arith.constant 0 : index
    %0 = vector.load %arg0[%c0, %c0_0] : memref<8x16xf32, #tpu.memory_space<vmem>>, vector<8x16xf32>
    %c0_1 = arith.constant 0 : index
    %c0_2 = arith.constant 0 : index
    %c0_3 = arith.constant 0 : index
    %1 = vector.load %arg1[%c0_1, %c0_2, %c0_3] : memref<4x128x128xf32, #tpu.memory_space<vmem>>, vector<1x128x128xf32>
    %2 = vector.shape_cast %1 : vector<1x128x128xf32> to vector<128x128xf32>
    %3 = vector.extract_strided_slice %2 {offsets = [0, 0], sizes = [16, 128], strides = [1, 1]} : vector<128x128xf32> to vector<16x128xf32>
    %cst = arith.constant dense<0.000000e+00> : vector<8x128xf32>
    %4 = tpu.matmul %0, %3, %cst {dimension_numbers = #tpu.dot_dimension_numbers<[1], [0], [0], [1], [0, 0, 1, 1], [], []>} : vector<8x16xf32>, vector<16x128xf32>, vector<8x128xf32> -> vector<8x128xf32>
    %c0_4 = arith.constant 0 : index
    %c0_5 = arith.constant 0 : index
    %5 = vector.load %arg2[%c0_4, %c0_5] : memref<8x128xf32, #tpu.memory_space<vmem>>, vector<1x128xf32>
    %c1 = arith.constant 1 : index
    %c0_6 = arith.constant 0 : index
    %6 = vector.load %arg2[%c1, %c0_6] : memref<8x128xf32, #tpu.memory_space<vmem>>, vector<1x128xf32>
    %cst_7 = arith.constant dense<0.000000e+00> : vector<128xf32>
    %7 = vector.multi_reduction <add>, %4, %cst_7 [0] : vector<8x128xf32> to vector<128xf32>
    %8 = vector.shape_cast %7 : vector<128xf32> to vector<1x128xf32>
    %cst_8 = arith.constant 1.250000e-01 : f32
    %9 = vector.broadcast %cst_8 : f32 to vector<1x128xf32>
    %10 = arith.mulf %8, %9 : vector<1x128xf32>
    %11 = arith.mulf %4, %4 : vector<8x128xf32>
    %cst_9 = arith.constant dense<0.000000e+00> : vector<128xf32>
    %12 = vector.multi_reduction <add>, %11, %cst_9 [0] : vector<8x128xf32> to vector<128xf32>
    %13 = vector.shape_cast %12 : vector<128xf32> to vector<1x128xf32>
    %cst_10 = arith.constant 1.250000e-01 : f32
    %14 = vector.broadcast %cst_10 : f32 to vector<1x128xf32>
    %15 = arith.mulf %13, %14 : vector<1x128xf32>
    %16 = arith.mulf %10, %10 : vector<1x128xf32>
    %17 = arith.subf %15, %16 : vector<1x128xf32>
    %cst_11 = arith.constant 9.99999974E-6 : f32
    %18 = vector.broadcast %cst_11 : f32 to vector<1x128xf32>
    %19 = arith.addf %17, %18 : vector<1x128xf32>
    %20 = math.rsqrt %19 : vector<1x128xf32>
    %21 = arith.mulf %5, %20 : vector<1x128xf32>
    %22 = arith.mulf %10, %21 : vector<1x128xf32>
    %23 = arith.subf %6, %22 : vector<1x128xf32>
    %24 = vector.broadcast %21 : vector<1x128xf32> to vector<8x128xf32>
    %25 = arith.mulf %4, %24 : vector<8x128xf32>
    %26 = vector.broadcast %23 : vector<1x128xf32> to vector<8x128xf32>
    %27 = arith.addf %25, %26 : vector<8x128xf32>
    %cst_12 = arith.constant 0.000000e+00 : f32
    %28 = vector.broadcast %cst_12 : f32 to vector<8x128xf32>
    %29 = arith.maximumf %27, %28 : vector<8x128xf32>
    %c1_13 = arith.constant 1 : index
    %c0_14 = arith.constant 0 : index
    %c0_15 = arith.constant 0 : index
    %30 = vector.load %arg1[%c1_13, %c0_14, %c0_15] : memref<4x128x128xf32, #tpu.memory_space<vmem>>, vector<1x128x128xf32>
    %31 = vector.shape_cast %30 : vector<1x128x128xf32> to vector<128x128xf32>
    %cst_16 = arith.constant dense<0.000000e+00> : vector<8x128xf32>
    %32 = tpu.matmul %29, %31, %cst_16 {dimension_numbers = #tpu.dot_dimension_numbers<[1], [0], [0], [1], [0, 0, 1, 1], [], []>} : vector<8x128xf32>, vector<128x128xf32>, vector<8x128xf32> -> vector<8x128xf32>
    %c2 = arith.constant 2 : index
    %c0_17 = arith.constant 0 : index
    %33 = vector.load %arg2[%c2, %c0_17] : memref<8x128xf32, #tpu.memory_space<vmem>>, vector<1x128xf32>
    %c3 = arith.constant 3 : index
    %c0_18 = arith.constant 0 : index
    %34 = vector.load %arg2[%c3, %c0_18] : memref<8x128xf32, #tpu.memory_space<vmem>>, vector<1x128xf32>
    %cst_19 = arith.constant dense<0.000000e+00> : vector<128xf32>
    %35 = vector.multi_reduction <add>, %32, %cst_19 [0] : vector<8x128xf32> to vector<128xf32>
    %36 = vector.shape_cast %35 : vector<128xf32> to vector<1x128xf32>
    %cst_20 = arith.constant 1.250000e-01 : f32
    %37 = vector.broadcast %cst_20 : f32 to vector<1x128xf32>
    %38 = arith.mulf %36, %37 : vector<1x128xf32>
    %39 = arith.mulf %32, %32 : vector<8x128xf32>
    %cst_21 = arith.constant dense<0.000000e+00> : vector<128xf32>
    %40 = vector.multi_reduction <add>, %39, %cst_21 [0] : vector<8x128xf32> to vector<128xf32>
    %41 = vector.shape_cast %40 : vector<128xf32> to vector<1x128xf32>
    %cst_22 = arith.constant 1.250000e-01 : f32
    %42 = vector.broadcast %cst_22 : f32 to vector<1x128xf32>
    %43 = arith.mulf %41, %42 : vector<1x128xf32>
    %44 = arith.mulf %38, %38 : vector<1x128xf32>
    %45 = arith.subf %43, %44 : vector<1x128xf32>
    %cst_23 = arith.constant 9.99999974E-6 : f32
    %46 = vector.broadcast %cst_23 : f32 to vector<1x128xf32>
    %47 = arith.addf %45, %46 : vector<1x128xf32>
    %48 = math.rsqrt %47 : vector<1x128xf32>
    %49 = arith.mulf %33, %48 : vector<1x128xf32>
    %50 = arith.mulf %38, %49 : vector<1x128xf32>
    %51 = arith.subf %34, %50 : vector<1x128xf32>
    %52 = vector.broadcast %49 : vector<1x128xf32> to vector<8x128xf32>
    %53 = arith.mulf %32, %52 : vector<8x128xf32>
    %54 = vector.broadcast %51 : vector<1x128xf32> to vector<8x128xf32>
    %55 = arith.addf %53, %54 : vector<8x128xf32>
    %cst_24 = arith.constant 0.000000e+00 : f32
    %56 = vector.broadcast %cst_24 : f32 to vector<8x128xf32>
    %57 = arith.maximumf %55, %56 : vector<8x128xf32>
    %c2_25 = arith.constant 2 : index
    %c0_26 = arith.constant 0 : index
    %c0_27 = arith.constant 0 : index
    %58 = vector.load %arg1[%c2_25, %c0_26, %c0_27] : memref<4x128x128xf32, #tpu.memory_space<vmem>>, vector<1x128x128xf32>
    %59 = vector.shape_cast %58 : vector<1x128x128xf32> to vector<128x128xf32>
    %cst_28 = arith.constant dense<0.000000e+00> : vector<8x128xf32>
    %60 = tpu.matmul %57, %59, %cst_28 {dimension_numbers = #tpu.dot_dimension_numbers<[1], [0], [0], [1], [0, 0, 1, 1], [], []>} : vector<8x128xf32>, vector<128x128xf32>, vector<8x128xf32> -> vector<8x128xf32>
    %c4 = arith.constant 4 : index
    %c0_29 = arith.constant 0 : index
    %61 = vector.load %arg2[%c4, %c0_29] : memref<8x128xf32, #tpu.memory_space<vmem>>, vector<1x128xf32>
    %c5 = arith.constant 5 : index
    %c0_30 = arith.constant 0 : index
    %62 = vector.load %arg2[%c5, %c0_30] : memref<8x128xf32, #tpu.memory_space<vmem>>, vector<1x128xf32>
    %cst_31 = arith.constant dense<0.000000e+00> : vector<128xf32>
    %63 = vector.multi_reduction <add>, %60, %cst_31 [0] : vector<8x128xf32> to vector<128xf32>
    %64 = vector.shape_cast %63 : vector<128xf32> to vector<1x128xf32>
    %cst_32 = arith.constant 1.250000e-01 : f32
    %65 = vector.broadcast %cst_32 : f32 to vector<1x128xf32>
    %66 = arith.mulf %64, %65 : vector<1x128xf32>
    %67 = arith.mulf %60, %60 : vector<8x128xf32>
    %cst_33 = arith.constant dense<0.000000e+00> : vector<128xf32>
    %68 = vector.multi_reduction <add>, %67, %cst_33 [0] : vector<8x128xf32> to vector<128xf32>
    %69 = vector.shape_cast %68 : vector<128xf32> to vector<1x128xf32>
    %cst_34 = arith.constant 1.250000e-01 : f32
    %70 = vector.broadcast %cst_34 : f32 to vector<1x128xf32>
    %71 = arith.mulf %69, %70 : vector<1x128xf32>
    %72 = arith.mulf %66, %66 : vector<1x128xf32>
    %73 = arith.subf %71, %72 : vector<1x128xf32>
    %cst_35 = arith.constant 9.99999974E-6 : f32
    %74 = vector.broadcast %cst_35 : f32 to vector<1x128xf32>
    %75 = arith.addf %73, %74 : vector<1x128xf32>
    %76 = math.rsqrt %75 : vector<1x128xf32>
    %77 = arith.mulf %61, %76 : vector<1x128xf32>
    %78 = arith.mulf %66, %77 : vector<1x128xf32>
    %79 = arith.subf %62, %78 : vector<1x128xf32>
    %80 = vector.broadcast %77 : vector<1x128xf32> to vector<8x128xf32>
    %81 = arith.mulf %60, %80 : vector<8x128xf32>
    %82 = vector.broadcast %79 : vector<1x128xf32> to vector<8x128xf32>
    %83 = arith.addf %81, %82 : vector<8x128xf32>
    %cst_36 = arith.constant 0.000000e+00 : f32
    %84 = vector.broadcast %cst_36 : f32 to vector<8x128xf32>
    %85 = arith.maximumf %83, %84 : vector<8x128xf32>
    %86 = arith.addf %85, %29 : vector<8x128xf32>
    %c3_37 = arith.constant 3 : index
    %c0_38 = arith.constant 0 : index
    %c0_39 = arith.constant 0 : index
    %87 = vector.load %arg1[%c3_37, %c0_38, %c0_39] : memref<4x128x128xf32, #tpu.memory_space<vmem>>, vector<1x128x128xf32>
    %88 = vector.shape_cast %87 : vector<1x128x128xf32> to vector<128x128xf32>
    %cst_40 = arith.constant dense<0.000000e+00> : vector<8x128xf32>
    %89 = tpu.matmul %86, %88, %cst_40 {dimension_numbers = #tpu.dot_dimension_numbers<[1], [0], [0], [1], [0, 0, 1, 1], [], []>} : vector<8x128xf32>, vector<128x128xf32>, vector<8x128xf32> -> vector<8x128xf32>
    %c6 = arith.constant 6 : index
    %c0_41 = arith.constant 0 : index
    %90 = vector.load %arg2[%c6, %c0_41] : memref<8x128xf32, #tpu.memory_space<vmem>>, vector<1x128xf32>
    %91 = vector.broadcast %90 : vector<1x128xf32> to vector<8x128xf32>
    %92 = arith.addf %89, %91 : vector<8x128xf32>
    %93 = vector.extract_strided_slice %92 {offsets = [0, 0], sizes = [8, 1], strides = [1, 1]} : vector<8x128xf32> to vector<8x1xf32>
    %c0_42 = arith.constant 0 : index
    %c0_43 = arith.constant 0 : index
    %94 = vector.load %arg3[%c0_42, %c0_43] : memref<8x1xf32, #tpu.memory_space<vmem>>, vector<8x1xf32>
    tpu.vector_store %arg3[%c0_42, %c0_43], %93 {strides = array<i32>} : memref<8x1xf32, #tpu.memory_space<vmem>>, vector<8x1xf32>,
    return
  }
}

</mosaic_0001>

<llo_original>
// kernel: forward.1
$region0: #{forward.1}
  #allocation0 [shape = 'u32[]', space=smem, size = 0x4, offset = 0x4, fixed_abs, tag = 'smem constant byte address 0x4 - core index']
  #allocation1 [shape = 'u32[72,128]{1,0:T(1,128)}', space=vmem, size = 0x9000, scoped, tag = 'internal scratch']
  %s0 = inlined_call_operand.hbm [shape: f32[8,16], index: 0, kind: input, shape index: {}]
  %s1 = inlined_call_operand.hbm [shape: f32[4,128,128], index: 1, kind: input, shape index: {}]
  %s2 = inlined_call_operand.hbm [shape: f32[8,128], index: 2, kind: input, shape index: {}]
  %s3 = inlined_call_operand.vmem [shape: f32[8,1], index: 3, kind: output, shape index: {}]
  %s4 = sld [smem:[#allocation0]]
  $region34: #{forward.1} parent=0
    _
  %s6 = ssub.s32 1, %s4
  %s7 = scalar_select 0, %s6, %s4
  $region1: #{forward.1} parent=0
    #allocation2 [shape = 'u8[4096]{0}', space=vmem, size = 0x1000, scoped, tag = 'input window, operand 0, single buffered']
    #allocation3 [shape = 's32[1]{0}', space=sflag, size = 0x4, scoped, tag = 'scoped memory for forward.1']
    #allocation4 [shape = 'u8[262144]{0}', space=vmem, size = 0x40000, scoped, tag = 'input window, operand 1, single buffered']
    #allocation5 [shape = 's32[1]{0}', space=sflag, size = 0x4, scoped, tag = 'scoped memory for forward.1']
    #allocation6 [shape = 'u8[4096]{0}', space=vmem, size = 0x1000, scoped, tag = 'input window, operand 2, single buffered']
    %8 = vsyncpa [#allocation3], 0
    %9 = vsyncpa [#allocation5], 0
    // Predicated region
    $region2: #{forward.1} parent=1 // pred_check
      _
    $region3: #{forward.1} parent=1 // pred_check_branch
      %11 = sbr.rel (0) target = $region5
    $region4: #{forward.1} parent=1 // pred_region
      %13 = vsyncadd [#allocation3], 0
      %s15 = sshll.u32 %s0, 4
      %s16 = int_to_ptr.hbm [resolvable:$true] %s15
      %s17 = sshll.u32 [#allocation2], 4
      %s18 = int_to_ptr.vmem [resolvable:$true] %s17
      %20 = dma.hbm_to_vmem [thread:$0]  %s16, 128, %s18, [#allocation3]
    $region5: #{forward.1} parent=1 // pred_fallthru
      _
    // Predicated region
    $region6: #{forward.1} parent=1 // pred_check
      _
    $region7: #{forward.1} parent=1 // pred_check_branch
      %22 = sbr.rel (0) target = $region9
    $region8: #{forward.1} parent=1 // pred_region
      %24 = vsyncadd [#allocation5], 0
      %s25 = sshll.u32 %s1, 4
      %s26 = int_to_ptr.hbm [resolvable:$true] %s25
      %s27 = sshll.u32 [#allocation4], 4
      %s28 = int_to_ptr.vmem [resolvable:$true] %s27
      %33 = dma.hbm_to_vmem [thread:$0]  %s26, 8192, %s28, [#allocation5], 128, 128, 8
    $region9: #{forward.1} parent=1 // pred_fallthru
      _
    // Predicated region
    $region10: #{forward.1} parent=1 // pred_check
      _
    $region11: #{forward.1} parent=1 // pred_check_branch
      %35 = sbr.rel (0) target = $region13
    $region12: #{forward.1} parent=1 // pred_region
      %37 = vsyncadd [#allocation5], 0
      %s39 = sshll.u32 %s2, 4
      %s40 = int_to_ptr.hbm [resolvable:$true] %s39
      %s41 = sshll.u32 [#allocation6], 4
      %s42 = int_to_ptr.vmem [resolvable:$true] %s41
      %44 = dma.hbm_to_vmem [thread:$0]  %s40, 128, %s42, [#allocation5]
    $region13: #{forward.1} parent=1 // pred_fallthru
      _
    // Predicated region
    $region14: #{forward.1} parent=1 // pred_check
      _
    $region15: #{forward.1} parent=1 // pred_check_branch
      %46 = sbr.rel (0) target = $region17
    $region16: #{forward.1} parent=1 // pred_region
      %48 = dma.done [#allocation3], 128
    $region17: #{forward.1} parent=1 // pred_fallthru
      _
    // Predicated region
    $region18: #{forward.1} parent=1 // pred_check
      _
    $region19: #{forward.1} parent=1 // pred_check_branch
      %50 = sbr.rel (0) target = $region21
    $region20: #{forward.1} parent=1 // pred_region
      %52 = dma.done [#allocation5], 8192
    $region21: #{forward.1} parent=1 // pred_fallthru
      _
    // Predicated region
    $region22: #{forward.1} parent=1 // pred_check
      _
    $region23: #{forward.1} parent=1 // pred_check_branch
      %54 = sbr.rel (0) target = $region25
    $region24: #{forward.1} parent=1 // pred_region
      %56 = dma.done [#allocation5], 128
    $region25: #{forward.1} parent=1 // pred_fallthru
      _
    %v57 = vld [vmem:[#allocation2] sm:$0xff]
    %v58 = vld [vmem:[#allocation4] sm:$0xff]
    %v59 = vld [vmem:[#allocation4 + $0x8] sm:$0xff]
    %vm60 = vcmask 130048
    %v62 = vsel %vm60, %v57, 0
    %64 = vmatpush.msra.mxu0 0.0
    %65 = vmatpush.msra.mxu0 0.0
    %66 = vmatpush.msra.mxu0 0.0
    %67 = vmatpush.msra.mxu0 0.0
    %68 = vmatpush.msra.mxu0 0.0
    %69 = vmatpush.msra.mxu0 0.0
    %70 = vmatpush.msra.mxu0 0.0
    %71 = vmatpush.msra.mxu0 0.0
    %72 = vmatpush.msra.mxu0 0.0
    %73 = vmatpush.msra.mxu0 0.0
    %74 = vmatpush.msra.mxu0 0.0
    %75 = vmatpush.msra.mxu0 0.0
    %76 = vmatpush.msra.mxu0 0.0
    %77 = vmatpush.msra.mxu0 0.0
    %78 = vmatpush.msra.mxu0 %v59
    %79 = vmatpush.msra.mxu0 %v58
    %80 = vmatmul.f32.gmra.mxu0 %v62
    %v81 = vpop.f32.mrf.mxu0
    %v82 = vadd.f32 0.0, %v81
    %83 = vdwg.mxu0
    %v84 = vld [vmem:[#allocation6] sm:$0x1]
    %v85 = vld [vmem:[#allocation6 + $0x1] sm:$0x1]
    %v86 = vrot.slane %v82, 4
    %v87 = vadd.f32 %v82, %v86
    %v88 = vrot.slane %v87, 2
    %v89 = vadd.f32 %v87, %v88
    %v90 = vrot.slane %v89, 1
    %v91 = vadd.f32 %v89, %v90
    %v92 = vmul.f32 %v91, 0.125
    %v93 = vmul.f32 %v82, %v82
    %v94 = vrot.slane %v93, 4
    %v95 = vadd.f32 %v93, %v94
    %v96 = vrot.slane %v95, 2
    %v97 = vadd.f32 %v95, %v96
    %v98 = vrot.slane %v97, 1
    %v99 = vadd.f32 %v97, %v98
    %v100 = vmul.f32 %v99, 0.125
    %v101 = vmul.f32 %v92, %v92
    %v102 = vsub.f32 %v100, %v101
    %v103 = vadd.f32 %v102, 1e-05
    %v104 = vrsqrt.pop %v103
    %v105 = vmul.f32 %v104, %v103
    %v106 = vmul.f32 %v105, %v104
    %v107 = vmul.f32 0.5, %v106
    %v108 = vsub.f32 1.5, %v107
    %v109 = vmul.f32 %v104, %v108
    %vm110 = vweird.f32 %v103
    %vm111 = vweird.f32 %v104
    %vm112 = vmor %vm110, %vm111
    %v113 = vsel %vm112, %v104, %v109
    %v114 = vmul.f32 %v84, %v113
    %v115 = vmul.f32 %v92, %v114
    %v116 = vsub.f32 %v85, %v115
    %v117 = vperm.slane %v114, 0
    %v118 = vmul.f32 %v82, %v117
    %v119 = vperm.slane %v116, 0
    %v120 = vadd.f32 %v118, %v119
    %v121 = vmax.f32 %v120, 0.0
    %s122 = scalar_lea.vmem [#allocation4], 128
    %v123 = vld [vmem:[%s122] sm:$0xff]
    %v124 = vld [vmem:[%s122 + $0x8] sm:$0xff]
    %v125 = vld [vmem:[%s122 + $0x10] sm:$0xff]
    %v126 = vld [vmem:[%s122 + $0x18] sm:$0xff]
    %v127 = vld [vmem:[%s122 + $0x20] sm:$0xff]
    %v128 = vld [vmem:[%s122 + $0x28] sm:$0xff]
    %v129 = vld [vmem:[%s122 + $0x30] sm:$0xff]
    %v130 = vld [vmem:[%s122 + $0x38] sm:$0xff]
    %v131 = vld [vmem:[%s122 + $0x40] sm:$0xff]
    %v132 = vld [vmem:[%s122 + $0x48] sm:$0xff]
    %v133 = vld [vmem:[%s122 + $0x50] sm:$0xff]
    %v134 = vld [vmem:[%s122 + $0x58] sm:$0xff]
    %v135 = vld [vmem:[%s122 + $0x60] sm:$0xff]
    %v136 = vld [vmem:[%s122 + $0x68] sm:$0xff]
    %v137 = vld [vmem:[%s122 + $0x70] sm:$0xff]
    %v138 = vld [vmem:[%s122 + $0x78] sm:$0xff]
    %139 = vmatpush.msra.mxu0 %v138
    %140 = vmatpush.msra.mxu0 %v137
    %141 = vmatpush.msra.mxu0 %v136
    %142 = vmatpush.msra.mxu0 %v135
    %143 = vmatpush.msra.mxu0 %v134
    %144 = vmatpush.msra.mxu0 %v133
    %145 = vmatpush.msra.mxu0 %v132
    %146 = vmatpush.msra.mxu0 %v131
    %147 = vmatpush.msra.mxu0 %v130
    %148 = vmatpush.msra.mxu0 %v129
    %149 = vmatpush.msra.mxu0 %v128
    %150 = vmatpush.msra.mxu0 %v127
    %151 = vmatpush.msra.mxu0 %v126
    %152 = vmatpush.msra.mxu0 %v125
    %153 = vmatpush.msra.mxu0 %v124
    %154 = vmatpush.msra.mxu0 %v123
    %155 = vmatmul.f32.gmra.mxu0 %v121
    %v156 = vpop.f32.mrf.mxu0
    %v157 = vadd.f32 0.0, %v156
    %158 = vdwg.mxu0
    %v159 = vld [vmem:[#allocation6 + $0x2] sm:$0x1]
    %v160 = vld [vmem:[#allocation6 + $0x3] sm:$0x1]
    %v161 = vrot.slane %v157, 4
    %v162 = vadd.f32 %v157, %v161
    %v163 = vrot.slane %v162, 2
    %v164 = vadd.f32 %v162, %v163
    %v165 = vrot.slane %v164, 1
    %v166 = vadd.f32 %v164, %v165
    %v167 = vmul.f32 %v166, 0.125
    %v168 = vmul.f32 %v157, %v157
    %v169 = vrot.slane %v168, 4
    %v170 = vadd.f32 %v168, %v169
    %v171 = vrot.slane %v170, 2
    %v172 = vadd.f32 %v170, %v171
    %v173 = vrot.slane %v172, 1
    %v174 = vadd.f32 %v172, %v173
    %v175 = vmul.f32 %v174, 0.125
    %v176 = vmul.f32 %v167, %v167
    %v177 = vsub.f32 %v175, %v176
    %v178 = vadd.f32 %v177, 1e-05
    %v179 = vrsqrt.pop %v178
    %v180 = vmul.f32 %v179, %v178
    %v181 = vmul.f32 %v180, %v179
    %v182 = vmul.f32 0.5, %v181
    %v183 = vsub.f32 1.5, %v182
    %v184 = vmul.f32 %v179, %v183
    %vm185 = vweird.f32 %v178
    %vm186 = vweird.f32 %v179
    %vm187 = vmor %vm185, %vm186
    %v188 = vsel %vm187, %v179, %v184
    %v189 = vmul.f32 %v159, %v188
    %v190 = vmul.f32 %v167, %v189
    %v191 = vsub.f32 %v160, %v190
    %v192 = vperm.slane %v189, 0
    %v193 = vmul.f32 %v157, %v192
    %v194 = vperm.slane %v191, 0
    %v195 = vadd.f32 %v193, %v194
    %v196 = vmax.f32 %v195, 0.0
    %s197 = scalar_lea.vmem [#allocation4], 256
    %v198 = vld [vmem:[%s197] sm:$0xff]
    %v199 = vld [vmem:[%s197 + $0x8] sm:$0xff]
    %v200 = vld [vmem:[%s197 + $0x10] sm:$0xff]
    %v201 = vld [vmem:[%s197 + $0x18] sm:$0xff]
    %v202 = vld [vmem:[%s197 + $0x20] sm:$0xff]
    %v203 = vld [vmem:[%s197 + $0x28] sm:$0xff]
    %v204 = vld [vmem:[%s197 + $0x30] sm:$0xff]
    %v205 = vld [vmem:[%s197 + $0x38] sm:$0xff]
    %v206 = vld [vmem:[%s197 + $0x40] sm:$0xff]
    %v207 = vld [vmem:[%s197 + $0x48] sm:$0xff]
    %v208 = vld [vmem:[%s197 + $0x50] sm:$0xff]
    %v209 = vld [vmem:[%s197 + $0x58] sm:$0xff]
    %v210 = vld [vmem:[%s197 + $0x60] sm:$0xff]
    %v211 = vld [vmem:[%s197 + $0x68] sm:$0xff]
    %v212 = vld [vmem:[%s197 + $0x70] sm:$0xff]
    %v213 = vld [vmem:[%s197 + $0x78] sm:$0xff]
    %214 = vmatpush.msra.mxu0 %v213
    %215 = vmatpush.msra.mxu0 %v212
    %216 = vmatpush.msra.mxu0 %v211
    %217 = vmatpush.msra.mxu0 %v210
    %218 = vmatpush.msra.mxu0 %v209
    %219 = vmatpush.msra.mxu0 %v208
    %220 = vmatpush.msra.mxu0 %v207
    %221 = vmatpush.msra.mxu0 %v206
    %222 = vmatpush.msra.mxu0 %v205
    %223 = vmatpush.msra.mxu0 %v204
    %224 = vmatpush.msra.mxu0 %v203
    %225 = vmatpush.msra.mxu0 %v202
    %226 = vmatpush.msra.mxu0 %v201
    %227 = vmatpush.msra.mxu0 %v200
    %228 = vmatpush.msra.mxu0 %v199
    %229 = vmatpush.msra.mxu0 %v198
    %230 = vmatmul.f32.gmra.mxu0 %v196
    %v231 = vpop.f32.mrf.mxu0
    %v232 = vadd.f32 0.0, %v231
    %233 = vdwg.mxu0
    %v234 = vld [vmem:[#allocation6 + $0x4] sm:$0x1]
    %v235 = vld [vmem:[#allocation6 + $0x5] sm:$0x1]
    %v236 = vrot.slane %v232, 4
    %v237 = vadd.f32 %v232, %v236
    %v238 = vrot.slane %v237, 2
    %v239 = vadd.f32 %v237, %v238
    %v240 = vrot.slane %v239, 1
    %v241 = vadd.f32 %v239, %v240
    %v242 = vmul.f32 %v241, 0.125
    %v243 = vmul.f32 %v232, %v232
    %v244 = vrot.slane %v243, 4
    %v245 = vadd.f32 %v243, %v244
    %v246 = vrot.slane %v245, 2
    %v247 = vadd.f32 %v245, %v246
    %v248 = vrot.slane %v247, 1
    %v249 = vadd.f32 %v247, %v248
    %v250 = vmul.f32 %v249, 0.125
    %v251 = vmul.f32 %v242, %v242
    %v252 = vsub.f32 %v250, %v251
    %v253 = vadd.f32 %v252, 1e-05
    %v254 = vrsqrt.pop %v253
    %v255 = vmul.f32 %v254, %v253
    %v256 = vmul.f32 %v255, %v254
    %v257 = vmul.f32 0.5, %v256
    %v258 = vsub.f32 1.5, %v257
    %v259 = vmul.f32 %v254, %v258
    %vm260 = vweird.f32 %v253
    %vm261 = vweird.f32 %v254
    %vm262 = vmor %vm260, %vm261
    %v263 = vsel %vm262, %v254, %v259
    %v264 = vmul.f32 %v234, %v263
    %v265 = vmul.f32 %v242, %v264
    %v266 = vsub.f32 %v235, %v265
    %v267 = vperm.slane %v264, 0
    %v268 = vmul.f32 %v232, %v267
    %v269 = vperm.slane %v266, 0
    %v270 = vadd.f32 %v268, %v269
    %v271 = vmax.f32 %v270, 0.0
    %v272 = vadd.f32 %v271, %v121
    %s273 = scalar_lea.vmem [#allocation4], 384
    %v274 = vld [vmem:[%s273] sm:$0xff]
    %v275 = vld [vmem:[%s273 + $0x8] sm:$0xff]
    %v276 = vld [vmem:[%s273 + $0x10] sm:$0xff]
    %v277 = vld [vmem:[%s273 + $0x18] sm:$0xff]
    %v278 = vld [vmem:[%s273 + $0x20] sm:$0xff]
    %v279 = vld [vmem:[%s273 + $0x28] sm:$0xff]
    %v280 = vld [vmem:[%s273 + $0x30] sm:$0xff]
    %v281 = vld [vmem:[%s273 + $0x38] sm:$0xff]
    %v282 = vld [vmem:[%s273 + $0x40] sm:$0xff]
    %v283 = vld [vmem:[%s273 + $0x48] sm:$0xff]
    %v284 = vld [vmem:[%s273 + $0x50] sm:$0xff]
    %v285 = vld [vmem:[%s273 + $0x58] sm:$0xff]
    %v286 = vld [vmem:[%s273 + $0x60] sm:$0xff]
    %v287 = vld [vmem:[%s273 + $0x68] sm:$0xff]
    %v288 = vld [vmem:[%s273 + $0x70] sm:$0xff]
    %v289 = vld [vmem:[%s273 + $0x78] sm:$0xff]
    %v290 = vld [vmem:[#allocation6 + $0x6] sm:$0x1]
    %v291 = vperm.slane %v290, 0
    %292 = vmatpush.msra.mxu0 %v289
    %293 = vmatpush.msra.mxu0 %v288
    %294 = vmatpush.msra.mxu0 %v287
    %295 = vmatpush.msra.mxu0 %v286
    %296 = vmatpush.msra.mxu0 %v285
    %297 = vmatpush.msra.mxu0 %v284
    %298 = vmatpush.msra.mxu0 %v283
    %299 = vmatpush.msra.mxu0 %v282
    %300 = vmatpush.msra.mxu0 %v281
    %301 = vmatpush.msra.mxu0 %v280
    %302 = vmatpush.msra.mxu0 %v279
    %303 = vmatpush.msra.mxu0 %v278
    %304 = vmatpush.msra.mxu0 %v277
    %305 = vmatpush.msra.mxu0 %v276
    %306 = vmatpush.msra.mxu0 %v275
    %307 = vmatpush.msra.mxu0 %v274
    %308 = vmatmul.f32.gmra.mxu0 %v272
    %v309 = vpop.f32.mrf.mxu0
    %v310 = vadd.f32 %v291, %v309
    %311 = vdwg.mxu0
    %vm312 = vcmask 7168
    %313 = vst.msk [vmem:[%s3] sm:$0xff] %vm312, %v310
    // Predicated region
    $region26: #{forward.1} parent=1 // pred_check
      _
    $region27: #{forward.1} parent=1 // pred_check_branch
      %315 = sbr.rel (0) target = $region29
    $region28: #{forward.1} parent=1 // pred_region
      _
    $region29: #{forward.1} parent=1 // pred_fallthru
      _
    // Predicated region
    $region30: #{forward.1} parent=1 // pred_check
      _
    $region31: #{forward.1} parent=1 // pred_check_branch
      %317 = sbr.rel (0) target = $region33
    $region32: #{forward.1} parent=1 // pred_region
      _
    $region33: #{forward.1} parent=1 // pred_fallthru
      _
    %318 = vsyncpa [#allocation3], 1
    %319 = vsyncpa [#allocation5], 1

</llo_original>
